<compile_context>
chip_gen: v7x
topology: tpu7x:2x2x1
jax: 0.10.0
libtpu: 0.0.40
codegen_flags: <defaults>
</compile_context>

<pallas_src>
import functools

import jax
import jax.numpy as jnp
from jax.experimental import pallas as pl
from jax.experimental.pallas import tpu as pltpu

_LANE_WIDTH = 512   # lane-dense slab width (multiple of 128) -> unmasked wide stores
_BLOCK_ROWS = 256   # rows per grid step (multiple of 8) -> 256*512*4B = 512 KiB / f32 buffer


def _dropout_train_kernel(x_ref, bits_ref, o_ref, *, thresh):
    # torch semantics: mask = rand(shape); x[mask < p] = 0
    # With u = bits / 2^32 uniform in [0,1):  (u < p)  <=>  (bits < round(p * 2^32)).
    # Keep the element where bits >= thresh, zero it otherwise (no rescale).
    x = x_ref[...]
    keep = bits_ref[...] >= jnp.uint32(thresh)
    o_ref[...] = jnp.where(keep, x, jnp.zeros_like(x))


def dropout(x, p, *, training=True, seed=0):
    """Pallas TPU version of the custom Dropout.forward.

    NOTE: the caller must vary `seed` per training step to get fresh masks.
    """
    if not training:
        # eval path: x * p in plain JAX (already HBM-roofline bound as one fused op).
        return x * jnp.asarray(p, dtype=x.dtype)

    n = x.size
    w = _LANE_WIDTH
    rows = pl.cdiv(n, w)
    padded = rows * w

    flat = x.reshape(-1)
    if padded != n:
        # Only pay the pad copy for ragged sizes; typical activations reshape cleanly.
        flat = jnp.pad(flat, (0, padded - n))
    x2d = flat.reshape(rows, w)

    # One uint32 of randomness per element, mirroring torch.rand(x.shape).
    bits2d = jax.random.bits(jax.random.PRNGKey(seed), (rows, w), dtype=jnp.uint32)

    # Integer threshold compare (drops 3 VPU ops + an int->f32 convert per vreg).
    thresh = min(int(round(float(p) * (1 << 32))), (1 << 32) - 1)

    block_rows = rows if rows <= _BLOCK_ROWS else _BLOCK_ROWS
    grid = (pl.cdiv(rows, block_rows),)

    out2d = pl.pallas_call(
        functools.partial(_dropout_train_kernel, thresh=thresh),
        out_shape=jax.ShapeDtypeStruct((rows, w), x.dtype),
        grid=grid,
        in_specs=[
            pl.BlockSpec((block_rows, w), lambda i: (i, 0)),   # x tile
            pl.BlockSpec((block_rows, w), lambda i: (i, 0)),   # random bits tile
        ],
        out_specs=pl.BlockSpec((block_rows, w), lambda i: (i, 0)),
        compiler_params=pltpu.CompilerParams(
            dimension_semantics=("parallel",),   # shard tiles across v7x's 2 TCs
        ),
    )(x2d, bits2d)

    if padded != n:
        return out2d.reshape(-1)[:n].reshape(x.shape)
    return out2d.reshape(x.shape)


if __name__ == "__main__":
    key = jax.random.PRNGKey(0)
    B, C, H, W = 2, 4, 16, 16  # NCHW, small AlexNet-style activation
    x = jax.random.normal(key, (B, C, H, W), dtype=jnp.float32)
    p = 0.5

    # training path (the hot path): random mask, zero where rand < p, no rescale
    y_train = dropout(x, p, training=True, seed=1234)
    jax.block_until_ready(y_train)

    # eval path: x * p
    y_eval = dropout(x, p, training=False)
    jax.block_until_ready(y_eval)

    # sanity checks
    assert y_train.shape == x.shape and y_train.dtype == x.dtype
    kept = y_train != 0.0
    assert bool(jnp.all(jnp.where(kept, y_train == x, True))), "kept values must be unchanged"
    zero_frac = float(jnp.mean(y_train == 0.0))
    assert 0.3 < zero_frac < 0.7, f"unexpected drop fraction {zero_frac}"
    assert bool(jnp.allclose(y_eval, x * p)), "eval path must be x * p"

    print("KERNEL_OK")
</pallas_src>

<mosaic_0001>
module attributes {stable_mosaic.version = 11 : i64} {
  func.func @_dropout_train_kernel(%arg0: i32, %arg1: memref<4x512xf32, #tpu.memory_space<vmem>>, %arg2: memref<4x512xi32, #tpu.memory_space<vmem>>, %arg3: memref<4x512xf32, #tpu.memory_space<vmem>>) attributes {dimension_semantics = [#tpu.dimension_semantics<parallel>], iteration_bounds = array<i64: 1>, scalar_prefetch = 0 : i64, scratch_operands = 0 : i64, tpu.core_type = #tpu.core_type<tc>, window_params = [{transform_indices = @transform_0, window_bounds = array<i64: 4, 512>}, {transform_indices = @transform_1, window_bounds = array<i64: 4, 512>}, {transform_indices = @transform_2, window_bounds = array<i64: 4, 512>}]} {
    %c0 = arith.constant 0 : index
    %c0_0 = arith.constant 0 : index
    %0 = vector.load %arg1[%c0, %c0_0] : memref<4x512xf32, #tpu.memory_space<vmem>>, vector<4x512xf32>
    %c0_1 = arith.constant 0 : index
    %c0_2 = arith.constant 0 : index
    %1 = vector.load %arg2[%c0_1, %c0_2] : memref<4x512xi32, #tpu.memory_space<vmem>>, vector<4x512xi32>
    %c-2147483648_i32 = arith.constant -2147483648 : i32
    %2 = vector.broadcast %c-2147483648_i32 : i32 to vector<4x512xi32>
    %3 = arith.cmpi uge, %1, %2 : vector<4x512xi32>
    %cst = arith.constant 0.000000e+00 : f32
    %4 = vector.broadcast %cst : f32 to vector<4x512xf32>
    %5 = arith.select %3, %0, %4 : vector<4x512xi1>, vector<4x512xf32>
    %c0_3 = arith.constant 0 : index
    %c0_4 = arith.constant 0 : index
    %6 = vector.load %arg3[%c0_3, %c0_4] : memref<4x512xf32, #tpu.memory_space<vmem>>, vector<4x512xf32>
    tpu.vector_store %arg3[%c0_3, %c0_4], %5 {strides = array<i32>} : memref<4x512xf32, #tpu.memory_space<vmem>>, vector<4x512xf32>,
    return
  }
  func.func @transform_0(%arg0: i32) -> (i32, i32) {
    %c0_i32 = arith.constant 0 : i32
    %c0_i32_0 = arith.constant 0 : i32
    return %arg0, %c0_i32 : i32, i32
  }
  func.func @transform_1(%arg0: i32) -> (i32, i32) {
    %c0_i32 = arith.constant 0 : i32
    %c0_i32_0 = arith.constant 0 : i32
    return %arg0, %c0_i32 : i32, i32
  }
  func.func @transform_2(%arg0: i32) -> (i32, i32) {
    %c0_i32 = arith.constant 0 : i32
    %c0_i32_0 = arith.constant 0 : i32
    return %arg0, %c0_i32 : i32, i32
  }
}

</mosaic_0001>

<llo_original>
// kernel: tpu_custom_call.1
$region0: #{tpu_custom_call.1}
  #allocation0 [shape = 'u32[]', space=smem, size = 0x4, offset = 0x4, fixed_abs, tag = 'smem constant byte address 0x4 - core index']
  #allocation1 [shape = 'u32[144,128]{1,0:T(1,128)}', space=vmem, size = 0x12000, scoped, tag = 'internal scratch']
  %s0 = inlined_call_operand.hbm [shape: f32[4,512], index: 0, kind: input, shape index: {}]
  %s1 = inlined_call_operand.hbm [shape: u32[4,512], index: 1, kind: input, shape index: {}]
  %s2 = inlined_call_operand.hbm [shape: f32[4,512], index: 2, kind: output, shape index: {}]
  %s3 = sld [smem:[#allocation0]]
  $region26: #{tpu_custom_call.1} parent=0
    _
  %s5 = ssub.s32 1, %s3
  %s6 = scalar_select 0, %s5, %s3
  $region1: #{tpu_custom_call.1} parent=0
    #allocation2 [shape = 'u8[8192]{0}', space=vmem, size = 0x2000, scoped, tag = 'input window, operand 0, single buffered']
    #allocation3 [shape = 's32[1]{0}', space=sflag, size = 0x4, scoped, tag = 'scoped memory for tpu_custom_call.1']
    #allocation4 [shape = 's32[1]{0}', space=sflag, size = 0x4, scoped, tag = 'scoped memory for tpu_custom_call.1']
    #allocation5 [shape = 'u8[8192]{0}', space=vmem, size = 0x2000, scoped, tag = 'input window, operand 1, single buffered']
    #allocation6 [shape = 's32[1]{0}', space=sflag, size = 0x4, scoped, tag = 'scoped memory for tpu_custom_call.1']
    #allocation7 [shape = 'u8[8192]{0}', space=vmem, size = 0x2000, scoped, tag = 'output window, operand 0, single buffered']
    %7 = vsyncpa [#allocation3], 0
    %8 = vsyncpa [#allocation6], 0
    %9 = vsyncpa [#allocation4], 0
    // Predicated region
    $region2: #{tpu_custom_call.1} parent=1 // pred_check
      _
    $region3: #{tpu_custom_call.1} parent=1 // pred_check_branch
      %11 = sbr.rel (0) target = $region5
    $region4: #{tpu_custom_call.1} parent=1 // pred_region
      %s13 = ssub.s32 256, 256
      %14 = vsyncadd [#allocation3], %s13
      %s16 = sshll.u32 [#allocation2], 4
      %s17 = int_to_ptr.vmem [resolvable:$true] %s16
      %19 = dma.hbm_to_vmem [thread:$0]  %s0, 256, %s17, [#allocation3]
    $region5: #{tpu_custom_call.1} parent=1 // pred_fallthru
      _
    // Predicated region
    $region6: #{tpu_custom_call.1} parent=1 // pred_check
      _
    $region7: #{tpu_custom_call.1} parent=1 // pred_check_branch
      %21 = sbr.rel (0) target = $region9
    $region8: #{tpu_custom_call.1} parent=1 // pred_region
      %s23 = ssub.s32 256, 256
      %24 = vsyncadd [#allocation6], %s23
      %s26 = sshll.u32 [#allocation5], 4
      %s27 = int_to_ptr.vmem [resolvable:$true] %s26
      %29 = dma.hbm_to_vmem [thread:$0]  %s1, 256, %s27, [#allocation6]
    $region9: #{tpu_custom_call.1} parent=1 // pred_fallthru
      _
    // Predicated region
    $region10: #{tpu_custom_call.1} parent=1 // pred_check
      _
    $region11: #{tpu_custom_call.1} parent=1 // pred_check_branch
      %31 = sbr.rel (0) target = $region13
    $region12: #{tpu_custom_call.1} parent=1 // pred_region
      %32 = dma.done [#allocation3], 256
    $region13: #{tpu_custom_call.1} parent=1 // pred_fallthru
      _
    // Predicated region
    $region14: #{tpu_custom_call.1} parent=1 // pred_check
      _
    $region15: #{tpu_custom_call.1} parent=1 // pred_check_branch
      %34 = sbr.rel (0) target = $region17
    $region16: #{tpu_custom_call.1} parent=1 // pred_region
      %35 = dma.done [#allocation6], 256
    $region17: #{tpu_custom_call.1} parent=1 // pred_fallthru
      _
    %v36 = vld [vmem:[#allocation2] sm:$0xff]
    %v37 = vld [vmem:[#allocation2 + $0x8] sm:$0xff]
    %v38 = vld [vmem:[#allocation5] sm:$0xff]
    %v39 = vld [vmem:[#allocation5 + $0x8] sm:$0xff]
    %vm40 = vcmp.ge.u32.totalorder %v38, 2147483648
    %vm41 = vcmp.ge.u32.totalorder %v39, 2147483648
    %v42 = vsel %vm40, %v36, 0.0
    %v43 = vsel %vm41, %v37, 0.0
    %44 = vst [vmem:[#allocation7] sm:$0xff] %v42
    %45 = vst [vmem:[#allocation7 + $0x8] sm:$0xff] %v43
    // Predicated region
    $region18: #{tpu_custom_call.1} parent=1 // pred_check
      _
    $region19: #{tpu_custom_call.1} parent=1 // pred_check_branch
      %47 = sbr.rel (0) target = $region21
    $region20: #{tpu_custom_call.1} parent=1 // pred_region
      %s49 = ssub.s32 256, 256
      %50 = vsyncadd [#allocation4], %s49
      %s52 = sshll.u32 [#allocation7], 4
      %s53 = int_to_ptr.vmem [resolvable:$true] %s52
      %55 = dma.vmem_to_hbm [thread:$0]  %s53, 256, %s2, [#allocation4]
    $region21: #{tpu_custom_call.1} parent=1 // pred_fallthru
      _
    // Predicated region
    $region22: #{tpu_custom_call.1} parent=1 // pred_check
      _
    $region23: #{tpu_custom_call.1} parent=1 // pred_check_branch
      %57 = sbr.rel (0) target = $region25
    $region24: #{tpu_custom_call.1} parent=1 // pred_region
      %58 = dma.done [#allocation4], 256
    $region25: #{tpu_custom_call.1} parent=1 // pred_fallthru
      _
    %59 = vsyncpa [#allocation3], 1
    %60 = vsyncpa [#allocation6], 1
    %61 = vsyncpa [#allocation4], 1

</llo_original>
